<compile_context>
chip_gen: v7x
topology: tpu7x:2x2x1
jax: 0.10.0
libtpu: 0.0.40
codegen_flags: <defaults>
</compile_context>

<pallas_src>
import functools

import jax
import jax.numpy as jnp
from jax.experimental import pallas as pl
from jax.experimental.pallas import tpu as pltpu


# --------------------------------------------------------------------------
# Kernels
# --------------------------------------------------------------------------
def _row_valid_mask(shape, block_rows, batch):
    """(block_rows, 1) bool mask: True for rows that belong to the real batch."""
    i = pl.program_id(0)
    row = jax.lax.broadcasted_iota(jnp.int32, shape, 0)
    return (i * block_rows + row) < batch


def _zlpr_hard_kernel(logits_ref, labels_ref, out_ref, *, block_rows, batch):
    x = logits_ref[...].astype(jnp.float32)
    t = labels_ref[...].astype(jnp.float32)
    neg_big = jnp.float32(-1e30)
    is_pos = t > 0.5

    # y = (1 - 2t) * x for binary t -> pure select, no multiply needed.
    y = jnp.where(is_pos, -x, x)

    # Row maxima of each branch, each joined with the appended zero logit.
    mn = jnp.maximum(
        jnp.max(jnp.where(is_pos, neg_big, y), axis=-1, keepdims=True), 0.0)
    mp = jnp.maximum(
        jnp.max(jnp.where(is_pos, y, neg_big), axis=-1, keepdims=True), 0.0)

    # Single exp per element: shift every element by the max of *its* branch
    # (mn/mp >= 0 and >= y within the branch, so exp args are <= 0 -> stable).
    e = jnp.exp(y - jnp.where(is_pos, mp, mn))
    sn = jnp.sum(jnp.where(is_pos, 0.0, e), axis=-1, keepdims=True) + jnp.exp(-mn)
    sp = jnp.sum(jnp.where(is_pos, e, 0.0), axis=-1, keepdims=True) + jnp.exp(-mp)

    loss = (jnp.log(sn) + mn) + (jnp.log(sp) + mp)               # (Bt, 1)

    # Mask padded tail rows BEFORE the reduce, emit one partial sum per tile.
    valid = _row_valid_mask(loss.shape, block_rows, batch)
    out_ref[...] = jnp.sum(jnp.where(valid, loss, 0.0), keepdims=True)


def _zlpr_soft_kernel(logits_ref, labels_ref, out_ref, *, block_rows, batch):
    x = logits_ref[...].astype(jnp.float32)
    t = labels_ref[...].astype(jnp.float32)
    infinity = jnp.float32(1e12)
    epsilon = jnp.float32(0.1)

    y_mask = x > (-infinity / 10.0)
    n_mask = jnp.logical_and(t < 1.0 - epsilon, y_mask)
    p_mask = jnp.logical_and(t > epsilon, y_mask)
    t_hat = jnp.clip(t, epsilon, 1.0 - epsilon)

    # negative branch: logsumexp over {x_k + log(1 - t_hat_k) : n_mask} U {0}.
    # log folded into multiplicative weight: (1 - t_hat) * exp(x - m); using
    # m >= true shifted max keeps exp stable, result identical up to ulps.
    xn = jnp.where(n_mask, x, -infinity)
    mn = jnp.maximum(jnp.max(xn, axis=-1, keepdims=True), 0.0)
    sn = (jnp.sum((1.0 - t_hat) * jnp.exp(xn - mn), axis=-1, keepdims=True)
          + jnp.exp(-mn))

    # positive branch: logsumexp over {-x_k + log(t_hat_k) : p_mask} U {0}.
    xp = jnp.where(p_mask, -x, -infinity)
    mp = jnp.maximum(jnp.max(xp, axis=-1, keepdims=True), 0.0)
    sp = (jnp.sum(t_hat * jnp.exp(xp - mp), axis=-1, keepdims=True)
          + jnp.exp(-mp))

    loss = (jnp.log(sn) + mn) + (jnp.log(sp) + mp)               # (Bt, 1)

    valid = _row_valid_mask(loss.shape, block_rows, batch)
    out_ref[...] = jnp.sum(jnp.where(valid, loss, 0.0), keepdims=True)


# --------------------------------------------------------------------------
# Wrapper
# --------------------------------------------------------------------------
def _sublane_multiple(dtype):
    """Dtype-packed sublane multiple: 8 for 4-byte, 16 for 2-byte, 32 for 1-byte."""
    size = jnp.dtype(dtype).itemsize
    if size >= 4:
        return 8
    if size == 2:
        return 16
    return 32


def _pick_block_rows(batch, num_classes, in_itemsize, sub):
    """Largest row-tile (multiple of `sub`) whose footprint — 2x double-buffered
    input tiles PLUS ~6 Bt*C f32 in-kernel temporaries — stays under ~28 MiB,
    which keeps headroom on every generation (incl. v7x's 64 MiB VMEM)."""
    budget = 28 * 1024 * 1024
    per_row = 2 * num_classes * max(1, int(in_itemsize)) + 6 * num_classes * 4
    bt = max(sub, (budget // per_row) // sub * sub)
    bt = min(bt, ((batch + sub - 1) // sub) * sub)   # don't exceed padded batch
    return int(bt)


def zlpr_loss(logits, labels, mode="hard_label", block_rows=None):
    """Pallas implementation of ZLPR_loss.forward (returns scalar mean loss)."""
    assert logits.shape == labels.shape
    if logits.ndim > 2:  # torch version reduces over all leading dims
        c = logits.shape[-1]
        logits = logits.reshape(-1, c)
        labels = labels.reshape(-1, c)
    if logits.ndim == 1:
        logits = logits[None, :]
        labels = labels[None, :]
    assert logits.ndim == 2
    batch, num_classes = logits.shape

    if mode == "hard_label":
        body = _zlpr_hard_kernel
    elif mode == "soft_label":
        body = _zlpr_soft_kernel
    else:
        raise ValueError(f"unknown mode: {mode}")

    sub = max(_sublane_multiple(logits.dtype), _sublane_multiple(labels.dtype))
    in_itemsize = logits.dtype.itemsize + labels.dtype.itemsize
    if block_rows is None:
        bt = _pick_block_rows(batch, num_classes, in_itemsize, sub)
    else:
        bt = ((max(int(block_rows), sub) + sub - 1) // sub) * sub
    num_tiles = pl.cdiv(batch, bt)

    kernel = functools.partial(body, block_rows=bt, batch=batch)

    # Explicit VMEM budget: inputs (double-buffered) + f32 temporaries + margin,
    # clamped to [16 MiB, 48 MiB] so it is safe on v5e/v6e (128 MiB physical)
    # and on v7x (64 MiB physical per TC).
    est_vmem = bt * num_classes * (2 * in_itemsize + 6 * 4) + (2 << 20)
    vmem_limit = int(min(max(est_vmem, 16 << 20), 48 << 20))

    per_tile = pl.pallas_call(
        kernel,
        out_shape=jax.ShapeDtypeStruct((num_tiles, 1), jnp.float32),
        grid=(num_tiles,),
        in_specs=[
            pl.BlockSpec((bt, num_classes), lambda i: (i, 0)),
            pl.BlockSpec((bt, num_classes), lambda i: (i, 0)),
        ],
        out_specs=pl.BlockSpec((1, 1), lambda i: (i, 0)),
        compiler_params=pltpu.CompilerParams(
            dimension_semantics=("parallel",),
            vmem_limit_bytes=vmem_limit),
    )(logits, labels)

    return jnp.sum(per_tile) / jnp.float32(batch)


# --------------------------------------------------------------------------
# Pure-JAX references (mirror the PyTorch module) — for verification
# --------------------------------------------------------------------------
def _ref_hard(labels, logits):
    y_true = labels.astype(jnp.float32)
    y_pred = logits.astype(jnp.float32)
    y_pred = (1.0 - 2.0 * y_true) * y_pred
    y_neg = y_pred - y_true * 1e30
    y_pos = y_pred - (1.0 - y_true) * 1e30
    zeros = jnp.zeros_like(y_pred[..., :1])
    neg = jax.scipy.special.logsumexp(jnp.concatenate([y_neg, zeros], -1), axis=-1)
    pos = jax.scipy.special.logsumexp(jnp.concatenate([y_pos, zeros], -1), axis=-1)
    return jnp.mean(neg + pos)


def _ref_soft(labels, logits):
    y_true = labels.astype(jnp.float32)
    y_pred = logits.astype(jnp.float32)
    infinity, epsilon = 1e12, 0.1
    y_mask = y_pred > -infinity / 10
    n_mask = (y_true < 1 - epsilon) & y_mask
    p_mask = (y_true > epsilon) & y_mask
    y_true = jnp.clip(y_true, epsilon, 1 - epsilon)
    y_neg = jnp.where(n_mask, y_pred, -infinity) + jnp.log(1 - y_true)
    y_pos = jnp.where(p_mask, -y_pred, -infinity) + jnp.log(y_true)
    zeros = jnp.zeros_like(y_pred[..., :1])
    neg = jax.scipy.special.logsumexp(jnp.concatenate([y_neg, zeros], -1), axis=-1)
    pos = jax.scipy.special.logsumexp(jnp.concatenate([y_pos, zeros], -1), axis=-1)
    return jnp.mean(neg + pos)


if __name__ == "__main__":
    B, C = 10, 256  # small multilabel problem: 10 samples, 256 classes
    key = jax.random.PRNGKey(0)
    k1, k2, k3 = jax.random.split(key, 3)
    logits = jax.random.normal(k1, (B, C), dtype=jnp.float32) * 2.0
    hard_labels = (jax.random.uniform(k2, (B, C)) < 0.1).astype(jnp.float32)
    soft_labels = jax.random.uniform(k3, (B, C), dtype=jnp.float32)

    # 1) hard_label mode, auto tile size (single tile; B=10 padded to Bt=16).
    loss_hard = jax.block_until_ready(zlpr_loss(logits, hard_labels, mode="hard_label"))
    ref_hard = _ref_hard(hard_labels, logits)
    assert jnp.allclose(loss_hard, ref_hard, rtol=1e-5, atol=1e-5), (loss_hard, ref_hard)

    # 2) hard_label mode with reduced-HBM-traffic dtypes (bf16 logits, int8
    #    labels); tile rounded to the int8-packed sublane multiple (32).
    logits_bf16 = logits.astype(jnp.bfloat16)
    hard_labels_i8 = hard_labels.astype(jnp.int8)
    loss_hard_lp = jax.block_until_ready(
        zlpr_loss(logits_bf16, hard_labels_i8, mode="hard_label", block_rows=32))
    ref_hard_lp = _ref_hard(hard_labels, logits_bf16.astype(jnp.float32))
    assert jnp.allclose(loss_hard_lp, ref_hard_lp, rtol=1e-5, atol=1e-5), (
        loss_hard_lp, ref_hard_lp)

    # 3) soft_label mode, multi-step grid with a padded last tile (bt=8 -> 2 tiles).
    loss_soft = jax.block_until_ready(
        zlpr_loss(logits, soft_labels, mode="soft_label", block_rows=8))
    ref_soft = _ref_soft(soft_labels, logits)
    assert jnp.allclose(loss_soft, ref_soft, rtol=1e-5, atol=1e-4), (loss_soft, ref_soft)

    print("KERNEL_OK")
</pallas_src>

<mosaic_0001>
module attributes {stable_mosaic.version = 11 : i64} {
  func.func @_zlpr_hard_kernel(%arg0: i32, %arg1: memref<16x256xf32, #tpu.memory_space<vmem>>, %arg2: memref<16x256xf32, #tpu.memory_space<vmem>>, %arg3: memref<1x1xf32, #tpu.memory_space<vmem>>) attributes {dimension_semantics = [#tpu.dimension_semantics<parallel>], iteration_bounds = array<i64: 1>, scalar_prefetch = 0 : i64, scratch_operands = 0 : i64, tpu.core_type = #tpu.core_type<tc>, window_params = [{transform_indices = @transform_0, window_bounds = array<i64: 16, 256>}, {transform_indices = @transform_1, window_bounds = array<i64: 16, 256>}, {transform_indices = @transform_2, window_bounds = array<i64: 1, 1>}]} {
    %c0 = arith.constant 0 : index
    %c0_0 = arith.constant 0 : index
    %0 = vector.load %arg1[%c0, %c0_0] : memref<16x256xf32, #tpu.memory_space<vmem>>, vector<16x256xf32>
    %c0_1 = arith.constant 0 : index
    %c0_2 = arith.constant 0 : index
    %1 = vector.load %arg2[%c0_1, %c0_2] : memref<16x256xf32, #tpu.memory_space<vmem>>, vector<16x256xf32>
    %cst = arith.constant 5.000000e-01 : f32
    %2 = vector.broadcast %cst : f32 to vector<16x256xf32>
    %3 = arith.cmpf ogt, %1, %2 : vector<16x256xf32>
    %cst_3 = arith.constant 0.000000e+00 : f32
    %4 = vector.broadcast %cst_3 : f32 to vector<16x256xf32>
    %5 = arith.subf %4, %0 : vector<16x256xf32>
    %6 = arith.select %3, %5, %0 : vector<16x256xi1>, vector<16x256xf32>
    %cst_4 = arith.constant -1.000000e+30 : f32
    %7 = vector.broadcast %cst_4 : f32 to vector<16x256xf32>
    %8 = arith.select %3, %7, %6 : vector<16x256xi1>, vector<16x256xf32>
    %cst_5 = arith.constant dense<0xFF800000> : vector<16xf32>
    %9 = vector.multi_reduction <maximumf>, %8, %cst_5 [1] : vector<16x256xf32> to vector<16xf32>
    %10 = vector.shape_cast %9 : vector<16xf32> to vector<16x1xf32>
    %cst_6 = arith.constant 0.000000e+00 : f32
    %11 = vector.broadcast %cst_6 : f32 to vector<16x1xf32>
    %12 = arith.maximumf %10, %11 : vector<16x1xf32>
    %cst_7 = arith.constant -1.000000e+30 : f32
    %13 = vector.broadcast %cst_7 : f32 to vector<16x256xf32>
    %14 = arith.select %3, %6, %13 : vector<16x256xi1>, vector<16x256xf32>
    %cst_8 = arith.constant dense<0xFF800000> : vector<16xf32>
    %15 = vector.multi_reduction <maximumf>, %14, %cst_8 [1] : vector<16x256xf32> to vector<16xf32>
    %16 = vector.shape_cast %15 : vector<16xf32> to vector<16x1xf32>
    %cst_9 = arith.constant 0.000000e+00 : f32
    %17 = vector.broadcast %cst_9 : f32 to vector<16x1xf32>
    %18 = arith.maximumf %16, %17 : vector<16x1xf32>
    %19 = vector.shape_cast %18 : vector<16x1xf32> to vector<16x1xf32>
    %20 = vector.broadcast %19 : vector<16x1xf32> to vector<16x256xf32>
    %21 = vector.shape_cast %12 : vector<16x1xf32> to vector<16x1xf32>
    %22 = vector.broadcast %21 : vector<16x1xf32> to vector<16x256xf32>
    %23 = arith.select %3, %20, %22 : vector<16x256xi1>, vector<16x256xf32>
    %24 = arith.subf %6, %23 : vector<16x256xf32>
    %25 = math.exp %24 : vector<16x256xf32>
    %cst_10 = arith.constant 0.000000e+00 : f32
    %26 = vector.broadcast %cst_10 : f32 to vector<16x256xf32>
    %27 = arith.select %3, %26, %25 : vector<16x256xi1>, vector<16x256xf32>
    %cst_11 = arith.constant dense<0.000000e+00> : vector<16xf32>
    %28 = vector.multi_reduction <add>, %27, %cst_11 [1] : vector<16x256xf32> to vector<16xf32>
    %29 = vector.shape_cast %28 : vector<16xf32> to vector<16x1xf32>
    %cst_12 = arith.constant 0.000000e+00 : f32
    %30 = vector.broadcast %cst_12 : f32 to vector<16x1xf32>
    %31 = arith.subf %30, %12 : vector<16x1xf32>
    %32 = math.exp %31 : vector<16x1xf32>
    %33 = arith.addf %29, %32 : vector<16x1xf32>
    %cst_13 = arith.constant 0.000000e+00 : f32
    %34 = vector.broadcast %cst_13 : f32 to vector<16x256xf32>
    %35 = arith.select %3, %25, %34 : vector<16x256xi1>, vector<16x256xf32>
    %cst_14 = arith.constant dense<0.000000e+00> : vector<16xf32>
    %36 = vector.multi_reduction <add>, %35, %cst_14 [1] : vector<16x256xf32> to vector<16xf32>
    %37 = vector.shape_cast %36 : vector<16xf32> to vector<16x1xf32>
    %cst_15 = arith.constant 0.000000e+00 : f32
    %38 = vector.broadcast %cst_15 : f32 to vector<16x1xf32>
    %39 = arith.subf %38, %18 : vector<16x1xf32>
    %40 = math.exp %39 : vector<16x1xf32>
    %41 = arith.addf %37, %40 : vector<16x1xf32>
    %42 = math.log %33 : vector<16x1xf32>
    %43 = arith.addf %42, %12 : vector<16x1xf32>
    %44 = math.log %41 : vector<16x1xf32>
    %45 = arith.addf %44, %18 : vector<16x1xf32>
    %46 = arith.addf %43, %45 : vector<16x1xf32>
    %47 = tpu.iota {dimensions = array<i32: 0>} : vector<16x1xi32>
    %c16_i32 = arith.constant 16 : i32
    %48 = arith.muli %arg0, %c16_i32 : i32
    %49 = vector.broadcast %48 : i32 to vector<16x1xi32>
    %50 = arith.addi %49, %47 : vector<16x1xi32>
    %c10_i32 = arith.constant 10 : i32
    %51 = vector.broadcast %c10_i32 : i32 to vector<16x1xi32>
    %52 = arith.cmpi slt, %50, %51 : vector<16x1xi32>
    %cst_16 = arith.constant 0.000000e+00 : f32
    %53 = vector.broadcast %cst_16 : f32 to vector<16x1xf32>
    %54 = arith.select %52, %46, %53 : vector<16x1xi1>, vector<16x1xf32>
    %55 = vector.shape_cast %54 : vector<16x1xf32> to vector<1x16x1xf32>
    %cst_17 = arith.constant dense<0.000000e+00> : vector<1xf32>
    %56 = vector.multi_reduction <add>, %55, %cst_17 [1, 2] : vector<1x16x1xf32> to vector<1xf32>
    %57 = vector.shape_cast %56 : vector<1xf32> to vector<1x1x1xf32>
    %58 = vector.extract %57[0, 0, 0] : f32 from vector<1x1x1xf32>
    %59 = vector.broadcast %58 : f32 to vector<1x1xf32>
    %c0_18 = arith.constant 0 : index
    %c0_19 = arith.constant 0 : index
    %60 = vector.load %arg3[%c0_18, %c0_19] : memref<1x1xf32, #tpu.memory_space<vmem>>, vector<1x1xf32>
    tpu.vector_store %arg3[%c0_18, %c0_19], %59 {strides = array<i32>} : memref<1x1xf32, #tpu.memory_space<vmem>>, vector<1x1xf32>,
    return
  }
  func.func @transform_0(%arg0: i32) -> (i32, i32) {
    %c0_i32 = arith.constant 0 : i32
    %c0_i32_0 = arith.constant 0 : i32
    return %arg0, %c0_i32 : i32, i32
  }
  func.func @transform_1(%arg0: i32) -> (i32, i32) {
    %c0_i32 = arith.constant 0 : i32
    %c0_i32_0 = arith.constant 0 : i32
    return %arg0, %c0_i32 : i32, i32
  }
  func.func @transform_2(%arg0: i32) -> (i32, i32) {
    %c0_i32 = arith.constant 0 : i32
    %c0_i32_0 = arith.constant 0 : i32
    return %arg0, %c0_i32 : i32, i32
  }
}

</mosaic_0001>

<llo_original>
// kernel: tpu_custom_call.1
$region0: #{tpu_custom_call.1}
  #allocation0 [shape = 'u32[]', space=smem, size = 0x4, offset = 0x4, fixed_abs, tag = 'smem constant byte address 0x4 - core index']
  #allocation1 [shape = 'u32[144,128]{1,0:T(1,128)}', space=vmem, size = 0x12000, scoped, tag = 'internal scratch']
  %s0 = inlined_call_operand.hbm [shape: f32[10,256], index: 0, kind: input, shape index: {}]
  %s1 = inlined_call_operand.hbm [shape: f32[10,256], index: 1, kind: input, shape index: {}]
  %s2 = inlined_call_operand.hbm [shape: f32[1,1], index: 2, kind: output, shape index: {}]
  %s3 = sld [smem:[#allocation0]]
  $region26: #{tpu_custom_call.1} parent=0
    _
  %s5 = ssub.s32 1, %s3
  %s6 = scalar_select 0, %s5, %s3
  $region1: #{tpu_custom_call.1} parent=0
    #allocation2 [shape = 'u8[16384]{0}', space=vmem, size = 0x4000, scoped, tag = 'input window, operand 0, single buffered']
    #allocation3 [shape = 's32[1]{0}', space=sflag, size = 0x4, scoped, tag = 'scoped memory for tpu_custom_call.1']
    #allocation4 [shape = 's32[1]{0}', space=sflag, size = 0x4, scoped, tag = 'scoped memory for tpu_custom_call.1']
    #allocation5 [shape = 'u8[16384]{0}', space=vmem, size = 0x4000, scoped, tag = 'input window, operand 1, single buffered']
    #allocation6 [shape = 's32[1]{0}', space=sflag, size = 0x4, scoped, tag = 'scoped memory for tpu_custom_call.1']
    #allocation7 [shape = 'u8[512]{0}', space=vmem, size = 0x400, scoped, tag = 'output window, operand 0, single buffered']
    %7 = vsyncpa [#allocation3], 0
    %8 = vsyncpa [#allocation6], 0
    %9 = vsyncpa [#allocation4], 0
    // Predicated region
    $region2: #{tpu_custom_call.1} parent=1 // pred_check
      _
    $region3: #{tpu_custom_call.1} parent=1 // pred_check_branch
      %11 = sbr.rel (0) target = $region5
    $region4: #{tpu_custom_call.1} parent=1 // pred_region
      %s13 = ssub.s32 512, 512
      %14 = vsyncadd [#allocation3], %s13
      %s15 = sshll.u32 [#allocation2], 4
      %s16 = int_to_ptr.vmem [resolvable:$true] %s15
      %21 = dma.hbm_to_vmem [thread:$0]  %s0, 512, %s16, [#allocation3], 256, 256, 16
    $region5: #{tpu_custom_call.1} parent=1 // pred_fallthru
      _
    // Predicated region
    $region6: #{tpu_custom_call.1} parent=1 // pred_check
      _
    $region7: #{tpu_custom_call.1} parent=1 // pred_check_branch
      %23 = sbr.rel (0) target = $region9
    $region8: #{tpu_custom_call.1} parent=1 // pred_region
      %s25 = ssub.s32 512, 512
      %26 = vsyncadd [#allocation6], %s25
      %s27 = sshll.u32 [#allocation5], 4
      %s28 = int_to_ptr.vmem [resolvable:$true] %s27
      %33 = dma.hbm_to_vmem [thread:$0]  %s1, 512, %s28, [#allocation6], 256, 256, 16
    $region9: #{tpu_custom_call.1} parent=1 // pred_fallthru
      _
    // Predicated region
    $region10: #{tpu_custom_call.1} parent=1 // pred_check
      _
    $region11: #{tpu_custom_call.1} parent=1 // pred_check_branch
      %35 = sbr.rel (0) target = $region13
    $region12: #{tpu_custom_call.1} parent=1 // pred_region
      %36 = dma.done [#allocation3], 512
    $region13: #{tpu_custom_call.1} parent=1 // pred_fallthru
      _
    // Predicated region
    $region14: #{tpu_custom_call.1} parent=1 // pred_check
      _
    $region15: #{tpu_custom_call.1} parent=1 // pred_check_branch
      %38 = sbr.rel (0) target = $region17
    $region16: #{tpu_custom_call.1} parent=1 // pred_region
      %39 = dma.done [#allocation6], 512
    $region17: #{tpu_custom_call.1} parent=1 // pred_fallthru
      _
    %v40 = vld [vmem:[#allocation2] sm:$0xff]
    %v41 = vld [vmem:[#allocation2 + $0x8] sm:$0xff]
    %v42 = vld [vmem:[#allocation2 + $0x10] sm:$0xff]
    %v43 = vld [vmem:[#allocation2 + $0x18] sm:$0xff]
    %v44 = vld [vmem:[#allocation5] sm:$0xff]
    %v45 = vld [vmem:[#allocation5 + $0x8] sm:$0xff]
    %v46 = vld [vmem:[#allocation5 + $0x10] sm:$0xff]
    %v47 = vld [vmem:[#allocation5 + $0x18] sm:$0xff]
    %vm48 = vcmp.gt.f32.partialorder %v44, 0.5
    %vm49 = vcmp.gt.f32.partialorder %v45, 0.5
    %vm50 = vcmp.gt.f32.partialorder %v46, 0.5
    %vm51 = vcmp.gt.f32.partialorder %v47, 0.5
    %v52 = vsub.f32 0.0, %v40
    %v53 = vsub.f32 0.0, %v41
    %v54 = vsub.f32 0.0, %v42
    %v55 = vsub.f32 0.0, %v43
    %v56 = vsel %vm48, %v52, %v40
    %v57 = vsel %vm49, %v53, %v41
    %v58 = vsel %vm50, %v54, %v42
    %v59 = vsel %vm51, %v55, %v43
    %v60 = vsel %vm48, -1e+30, %v40
    %v61 = vsel %vm49, -1e+30, %v41
    %v62 = vsel %vm50, -1e+30, %v42
    %v63 = vsel %vm51, -1e+30, %v43
    %v64 = vmax.f32 %v60, %v61
    %65 = vmax.xlane.f32.xlu0 %v64
    %v66 = vpop.xlane.xlu0 %65
    %v67 = vmax.f32 %v62, %v63
    %68 = vmax.xlane.f32.xlu0 %v67
    %v69 = vpop.xlane.xlu0 %68
    %v70 = vmax.f32 %v66, 0.0
    %v71 = vmax.f32 %v69, 0.0
    %v72 = vsel %vm48, %v52, -1e+30
    %v73 = vsel %vm49, %v53, -1e+30
    %v74 = vsel %vm50, %v54, -1e+30
    %v75 = vsel %vm51, %v55, -1e+30
    %v76 = vmax.f32 %v72, %v73
    %77 = vmax.xlane.f32.xlu0 %v76
    %v78 = vpop.xlane.xlu0 %77
    %v79 = vmax.f32 %v74, %v75
    %80 = vmax.xlane.f32.xlu0 %v79
    %v81 = vpop.xlane.xlu0 %80
    %v82 = vmax.f32 %v78, 0.0
    %v83 = vmax.f32 %v81, 0.0
    %v84 = vsel %vm48, %v82, %v70
    %v85 = vsel %vm49, %v82, %v70
    %v86 = vsel %vm50, %v83, %v71
    %v87 = vsel %vm51, %v83, %v71
    %v88 = vsub.f32 %v56, %v84
    %v89 = vsub.f32 %v57, %v85
    %v90 = vsub.f32 %v58, %v86
    %v91 = vsub.f32 %v59, %v87
    %v92 = vmul.f32 %v88, 1.442695
    %v93 = vpow.pop %v92
    %v94 = vmul.f32 %v89, 1.442695
    %v95 = vpow.pop %v94
    %v96 = vmul.f32 %v90, 1.442695
    %v97 = vpow.pop %v96
    %v98 = vmul.f32 %v91, 1.442695
    %v99 = vpow.pop %v98
    %v100 = vsel %vm48, 0.0, %v93
    %v101 = vsel %vm49, 0.0, %v95
    %v102 = vsel %vm50, 0.0, %v97
    %v103 = vsel %vm51, 0.0, %v99
    %v104 = vadd.f32 %v100, %v101
    %105 = vadd.xlane.f32.xlu0 %v104
    %v106 = vpop.xlane.xlu0 %105
    %v107 = vadd.f32 %v102, %v103
    %108 = vadd.xlane.f32.xlu0 %v107
    %v109 = vpop.xlane.xlu0 %108
    %v110 = vsub.f32 0.0, %v70
    %v111 = vsub.f32 0.0, %v71
    %v112 = vmul.f32 %v110, 1.442695
    %v113 = vpow.pop %v112
    %v114 = vmul.f32 %v111, 1.442695
    %v115 = vpow.pop %v114
    %v116 = vadd.f32 %v106, %v113
    %v117 = vadd.f32 %v109, %v115
    %v118 = vsel %vm48, %v93, 0.0
    %v119 = vsel %vm49, %v95, 0.0
    %v120 = vsel %vm50, %v97, 0.0
    %v121 = vsel %vm51, %v99, 0.0
    %v122 = vadd.f32 %v118, %v119
    %123 = vadd.xlane.f32.xlu0 %v122
    %v124 = vpop.xlane.xlu0 %123
    %v125 = vadd.f32 %v120, %v121
    %126 = vadd.xlane.f32.xlu0 %v125
    %v127 = vpop.xlane.xlu0 %126
    %v128 = vsub.f32 0.0, %v82
    %v129 = vsub.f32 0.0, %v83
    %v130 = vmul.f32 %v128, 1.442695
    %v131 = vpow.pop %v130
    %v132 = vmul.f32 %v129, 1.442695
    %v133 = vpow.pop %v132
    %v134 = vadd.f32 %v124, %v131
    %v135 = vadd.f32 %v127, %v133
    %v136 = vlog2.pop %v116
    %v137 = vmul.f32 %v136, 0.6931472
    %v138 = vlog2.pop %v117
    %v139 = vmul.f32 %v138, 0.6931472
    %v140 = vadd.f32 %v137, %v70
    %v141 = vadd.f32 %v139, %v71
    %v142 = vlog2.pop %v134
    %v143 = vmul.f32 %v142, 0.6931472
    %v144 = vlog2.pop %v135
    %v145 = vmul.f32 %v144, 0.6931472
    %v146 = vadd.f32 %v143, %v82
    %v147 = vadd.f32 %v145, %v83
    %v148 = vadd.f32 %v140, %v146
    %v149 = vadd.f32 %v141, %v147
    %v150 = vlaneseq
    %v151 = vshrl.u32 %v150, 7
    %v152 = vadd.s32 %v151, 8
    %s153 = smul.u32 0, 16
    %v154 = vstv %s153
    %v155 = vadd.s32 %v154, %v151
    %v156 = vadd.s32 %v154, %v152
    %vm157 = vcmp.lt.s32.totalorder %v155, 10
    %vm158 = vcmp.lt.s32.totalorder %v156, 10
    %v159 = vsel %vm157, %v148, 0.0
    %v160 = vsel %vm158, %v149, 0.0
    %vm161 = vcmask 7168
    %v162 = vsel %vm161, %v159, 0.0
    %v163 = vsel %vm161, %v160, 0.0
    %v164 = vadd.f32 %v162, %v163
    %165 = vadd.xlane.f32.xlu0 %v164
    %v166 = vpop.xlane.xlu0 %165
    %v167 = vrot.slane %v166, 4
    %v168 = vadd.f32 %v166, %v167
    %v169 = vrot.slane %v168, 2
    %v170 = vadd.f32 %v168, %v169
    %v171 = vrot.slane %v170, 1
    %v172 = vadd.f32 %v170, %v171
    %s173 = vtos %v172
    %v174 = vstv %s173
    %vm175 = vcmask 0
    %176 = vst.msk [vmem:[#allocation7] sm:$0x1] %vm175, %v174
    // Predicated region
    $region18: #{tpu_custom_call.1} parent=1 // pred_check
      _
    $region19: #{tpu_custom_call.1} parent=1 // pred_check_branch
      %178 = sbr.rel (0) target = $region21
    $region20: #{tpu_custom_call.1} parent=1 // pred_region
      %s180 = ssub.s32 16, 16
      %181 = vsyncadd [#allocation4], %s180
      %s183 = sshll.u32 [#allocation7], 4
      %s184 = int_to_ptr.vmem [resolvable:$true] %s183
      %186 = dma.vmem_to_hbm [thread:$0]  %s184, 16, %s2, [#allocation4]
    $region21: #{tpu_custom_call.1} parent=1 // pred_fallthru
      _
    // Predicated region
    $region22: #{tpu_custom_call.1} parent=1 // pred_check
      _
    $region23: #{tpu_custom_call.1} parent=1 // pred_check_branch
      %188 = sbr.rel (0) target = $region25
    $region24: #{tpu_custom_call.1} parent=1 // pred_region
      %189 = dma.done [#allocation4], 16
    $region25: #{tpu_custom_call.1} parent=1 // pred_fallthru
      _
    %190 = vsyncpa [#allocation3], 1
    %191 = vsyncpa [#allocation6], 1
    %192 = vsyncpa [#allocation4], 1

</llo_original>
